<compile_context>
chip_gen: v6e
topology: v6e:2x2x1
jax: 0.10.0
libtpu: 0.0.40
codegen_flags: <defaults>
</compile_context>

<pallas_src>
import jax
import jax.numpy as jnp
from jax.experimental import pallas as pl
from jax.experimental.pallas import tpu as pltpu


def _copy_kernel(x_ref, o_ref):
    # Pure identity copy: the axis-1 <-> axis-2 permute is expressed by the BlockSpec
    # index maps, so the body is straight vld/vst with no relayout work.
    o_ref[...] = x_ref[...]


def _default_target_block_bytes():
    """Generation-aware per-block byte budget (double-buffered working set ~4x this)."""
    try:
        kind = jax.devices()[0].device_kind.lower()
    except Exception:
        kind = ""
    if "v6" in kind or "v7" in kind:
        return 4 << 20   # 16 MiB working set < 32 MiB scoped-VMEM default
    return 2 << 20       # v5e / unknown: 8 MiB working set < 16 MiB scoped default


def _pick_rows(extent, row_bytes, sub, budget_bytes):
    """Rows (along the tiled permuted axis) per block: the full extent if it fits the
    budget, otherwise the largest sublane-pack multiple that does (at least one pack)."""
    if extent * row_bytes <= budget_bytes or extent <= sub:
        return extent
    ti = (budget_bytes // (row_bytes * sub)) * sub
    return max(sub, min(ti, extent))


def permute_axes_1_2(x5, *, target_block_bytes=None, min_pallas_bytes=1 << 20):
    """Swap axes 1 and 2 of a 5-D array: (B, A1, A2, H, W) -> (B, A2, A1, H, W)."""
    B, A1, A2, H, W = x5.shape
    itemsize = x5.dtype.itemsize
    total_bytes = x5.size * itemsize
    HW = H * W

    # Degenerate permutes are pure reshapes of contiguous memory.
    if A1 == 1 or A2 == 1:
        return jnp.swapaxes(x5, 1, 2)
    # Tiny tensors: pallas_call launch + pipeline ramp dominates; let XLA fuse a transpose.
    if total_bytes < min_pallas_bytes:
        return jnp.swapaxes(x5, 1, 2)
    # TODO(synk): add a masked-store Pallas variant for H*W not a multiple of 128; the
    # lane-dense path below requires it, so fall back to an XLA transpose for now.
    if HW % 128 != 0:
        return jnp.swapaxes(x5, 1, 2)

    if target_block_bytes is None:
        target_block_bytes = _default_target_block_bytes()

    sub = max(8, 32 // itemsize)        # full sublane pack: 8 f32 / 16 bf16 / 32 int8
    row_bytes = HW * itemsize
    if min(A1, sub) * row_bytes > max(target_block_bytes, 8 << 20):
        # Even the smallest legal tile would strain scoped VMEM: bail out to XLA.
        return jnp.swapaxes(x5, 1, 2)

    TI = _pick_rows(A1, row_bytes, sub, target_block_bytes)
    n_i = pl.cdiv(A1, TI)               # ragged edge handled by Pallas

    # Free reinterpretations of contiguous memory (no data movement).
    x3 = x5.reshape(B, A1, A2 * HW)

    out3 = pl.pallas_call(
        _copy_kernel,
        out_shape=jax.ShapeDtypeStruct((B * A2, A1, HW), x5.dtype),
        # a1-tile axis innermost -> consecutive steps write contiguous output in HBM.
        grid=(B, A2, n_i),
        in_specs=[
            pl.BlockSpec((1, TI, HW), lambda b, j, i: (b, i, j)),
        ],
        out_specs=pl.BlockSpec((1, TI, HW), lambda b, j, i: (b * A2 + j, i, 0)),
        compiler_params=pltpu.CompilerParams(
            # All axes independent; A2 >= 2 on this path, so megacore (v7x) always has
            # at least 2 parallel blocks to split across TensorCores.
            dimension_semantics=("parallel", "parallel", "parallel"),
        ),
        cost_estimate=pl.CostEstimate(
            flops=0, transcendentals=0, bytes_accessed=2 * total_bytes),
    )(x3)

    return out3.reshape(B, A2, A1, H, W)


class ReshapeVideo:
    """JAX/Pallas equivalent of the PyTorch ReshapeVideo module."""

    def __init__(self, num_frames, min_pallas_bytes=1 << 20):
        self.frame_num = num_frames
        self.min_pallas_bytes = min_pallas_bytes

    def __call__(self, x):
        shape_size = x.ndim
        assert shape_size == 4 or shape_size == 5
        if shape_size == 4:
            # (B*T, C, H, W) -> (B, T, C, H, W)  [leading-dim split: free glue]
            n, c, h, w = x.shape
            assert n % self.frame_num == 0, (
                f"leading dim {n} not divisible by frame_num {self.frame_num}"
            )
            x5 = x.reshape(-1, self.frame_num, c, h, w)
            # (B, T, C, H, W) -> (B, C, T, H, W)  [Pallas permute]
            return permute_axes_1_2(x5, min_pallas_bytes=self.min_pallas_bytes)
        else:
            # Mirrors the PyTorch module's stateful update of frame_num.
            self.frame_num = x.shape[2]
            # (B, C, T, H, W) -> (B, T, C, H, W)  [Pallas permute]
            y = permute_axes_1_2(x, min_pallas_bytes=self.min_pallas_bytes)
            # (B, T, C, H, W) -> (B*T, C, H, W)   [leading-dim merge: free glue]
            return y.reshape(-1, y.shape[2], y.shape[3], y.shape[4])


if __name__ == "__main__":
    key = jax.random.PRNGKey(0)
    B, T, C, H, W = 2, 4, 4, 16, 16
    k1, k2 = jax.random.split(key)

    # min_pallas_bytes=0 forces the Pallas path even at these small self-test shapes.
    mod = ReshapeVideo(num_frames=T, min_pallas_bytes=0)

    # ---- 4D path: (B*T, C, H, W) -> (B, C, T, H, W) ----
    x4 = jax.random.normal(k1, (B * T, C, H, W), dtype=jnp.float32)
    out4 = jax.block_until_ready(mod(x4))
    ref4 = jnp.transpose(x4.reshape(B, T, C, H, W), (0, 2, 1, 3, 4))
    assert out4.shape == (B, C, T, H, W)
    assert jnp.array_equal(out4, ref4)

    # ---- 5D path: (B, C, T, H, W) -> (B*T, C, H, W) ----
    x5 = jax.random.normal(k2, (B, C, T, H, W), dtype=jnp.float32)
    out5 = jax.block_until_ready(mod(x5))
    ref5 = jnp.transpose(x5, (0, 2, 1, 3, 4)).reshape(B * T, C, H, W)
    assert out5.shape == (B * T, C, H, W)
    assert jnp.array_equal(out5, ref5)

    print("KERNEL_OK")
</pallas_src>

<mosaic_0001>
module attributes {stable_mosaic.version = 11 : i64} {
  func.func @_copy_kernel(%arg0: i32, %arg1: i32, %arg2: i32, %arg3: memref<1x4x256xf32, #tpu.memory_space<vmem>>, %arg4: memref<1x4x256xf32, #tpu.memory_space<vmem>>) attributes {dimension_semantics = [#tpu.dimension_semantics<parallel>, #tpu.dimension_semantics<parallel>, #tpu.dimension_semantics<parallel>], iteration_bounds = array<i64: 2, 4, 1>, scalar_prefetch = 0 : i64, scratch_operands = 0 : i64, tpu.core_type = #tpu.core_type<tc>, window_params = [{transform_indices = @transform_0, window_bounds = array<i64: 1, 4, 256>}, {transform_indices = @transform_1, window_bounds = array<i64: 1, 4, 256>}]} {
    %c0 = arith.constant 0 : index
    %c0_0 = arith.constant 0 : index
    %c0_1 = arith.constant 0 : index
    %0 = vector.load %arg3[%c0, %c0_0, %c0_1] : memref<1x4x256xf32, #tpu.memory_space<vmem>>, vector<1x4x256xf32>
    %c0_2 = arith.constant 0 : index
    %c0_3 = arith.constant 0 : index
    %c0_4 = arith.constant 0 : index
    %1 = vector.load %arg4[%c0_2, %c0_3, %c0_4] : memref<1x4x256xf32, #tpu.memory_space<vmem>>, vector<1x4x256xf32>
    tpu.vector_store %arg4[%c0_2, %c0_3, %c0_4], %0 {strides = array<i32>} : memref<1x4x256xf32, #tpu.memory_space<vmem>>, vector<1x4x256xf32>,
    return
  }
  func.func @transform_0(%arg0: i32, %arg1: i32, %arg2: i32) -> (i32, i32, i32) {
    %c0_i32 = arith.constant 0 : i32
    return %arg0, %arg2, %arg1 : i32, i32, i32
  }
  func.func @transform_1(%arg0: i32, %arg1: i32, %arg2: i32) -> (i32, i32, i32) {
    %c4_i32 = arith.constant 4 : i32
    %0 = arith.muli %arg0, %c4_i32 : i32
    %1 = arith.addi %0, %arg1 : i32
    %c0_i32 = arith.constant 0 : i32
    %c0_i32_0 = arith.constant 0 : i32
    return %1, %arg2, %c0_i32 : i32, i32, i32
  }
}

</mosaic_0001>

<llo_original>
// kernel: tpu_custom_call.1
$region0: #{tpu_custom_call.1}
  #allocation0 [shape = 'u32[]', space=smem, size = 0x4, offset = 0x4, fixed_abs, tag = 'smem constant byte address 0x4 - core index']
  #allocation1 [shape = 'u32[144,128]{1,0:T(1,128)}', space=vmem, size = 0x12000, scoped, tag = 'internal scratch']
  %s0 = inlined_call_operand.hbm [shape: f32[2,4,1024], index: 0, kind: input, shape index: {}]
  %s1 = inlined_call_operand.hbm [shape: f32[8,4,256], index: 1, kind: output, shape index: {}]
  %s2 = sld [smem:[#allocation0]]
  $region41: #{tpu_custom_call.1} parent=0
    _
  %s4 = ssub.s32 1, %s2
  %s5 = scalar_select 0, %s4, %s2
  $region1: #{tpu_custom_call.1} parent=0
    #allocation2 [shape = 'u8[8192]{0}', space=vmem, size = 0x2000, scoped, tag = 'input window, operand 0']
    #allocation3 [shape = 's32[2]{0}', space=sflag, size = 0x8, scoped, tag = 'scoped memory for tpu_custom_call.1']
    #allocation4 [shape = 's32[2]{0}', space=sflag, size = 0x8, scoped, tag = 'scoped memory for tpu_custom_call.1']
    #allocation5 [shape = 'u8[8192]{0}', space=vmem, size = 0x2000, scoped, tag = 'output window, operand 0']
    %6 = vsyncpa [#allocation3], 0
    %s7 = scalar_lea.sflag [#allocation3], 1
    %8 = vsyncpa %s7, 0
    %9 = vsyncpa [#allocation4], 0
    %s10 = scalar_lea.sflag [#allocation4], 1
    %11 = vsyncpa %s10, 0
    loop: start=0, step=1, limit=10
    $region2: #{tpu_custom_call.1} parent=1 // loop_pre_header
      _
    $region3: #{tpu_custom_call.1} parent=1 // loop_header
      %s13 = sphi 0, %s17
      %p14 = scmp.ge.s32.totalorder %s13, 10
      %s20 = sphi 0, %s39
      %s21 = sphi 0, %s35
      %s22 = sphi 0, %s31
      %s23 = sphi 0, %s20
      %s24 = sphi 0, %s21
      %s25 = sphi 0, %s22
      %s26 = sphi 0, %s23
      %s27 = sphi 0, %s24
      %s28 = sphi 0, %s25
      %s46 = sphi 0, %s48
      %s49 = sphi 0, %s46
      %s50 = sphi 0, %s49
      %s66 = sphi 0, %s50
      %s78 = sphi 0, %s80
      %s81 = sphi 0, %s78
      %s82 = sphi 0, %s81
      %s98 = sphi 0, %s82
    $region4: #{tpu_custom_call.1} parent=1 // loop_header_branch
      %16 = sbr.rel (%p14) target = $region8
    $region5: #{tpu_custom_call.1} parent=1 // loop_body
      %s18 = ssub.s32 %s13, 1
      %s19 = ssub.s32 %s13, 2
      %s29 = sadd.s32 1, %s22
      %p30 = scmp.ge.s32.totalorder %s29, 1
      %s31 = scalar_select %p30, 0, %s29
      %s32 = sadd.s32 1, %s21
      %s33 = scalar_select %p30, %s32, %s21
      %p34 = scmp.ge.s32.totalorder %s33, 4
      %s35 = scalar_select %p34, 0, %s33
      %s36 = sadd.s32 1, %s20
      %s37 = scalar_select %p34, %s36, %s20
      %p38 = scmp.ge.s32.totalorder %s37, 2
      %s39 = scalar_select %p38, 0, %s37
      %s40 = ssub.s32 %s20, %s39
      %s41 = ssub.s32 %s22, %s31
      %s42 = sor.u32 %s40, %s41
      %s43 = ssub.s32 %s21, %s35
      %s44 = sor.u32 %s42, %s43
      %p45 = scmp.eq.s32.totalorder %s44, 0
      %s47 = sadd.s32 %s46, 1
      %s48 = scalar_select %p45, %s46, %s47
      %p51 = pneg %p45
      %p52 = scmp.eq.s32.totalorder %s13, 7
      %p53 = por %p51, %p52
      %p54 = scmp.ne.s32.totalorder %s46, %s49
      %p55 = scmp.eq.s32.totalorder %s13, 0
      %p56 = por %p54, %p55
      %p57 = scmp.ne.s32.totalorder %s46, %s49
      %p58 = scmp.eq.s32.totalorder %s18, 7
      %p59 = por %p57, %p58
      %p60 = scmp.ne.s32.totalorder %s49, %s50
      %p61 = scmp.eq.s32.totalorder %s18, 0
      %p62 = por %p60, %p61
      %p63 = scmp.ne.s32.totalorder %s49, %s50
      %p64 = scmp.eq.s32.totalorder %s19, 7
      %p65 = por %p63, %p64
      %p67 = scmp.ne.s32.totalorder %s50, %s66
      %p68 = scmp.eq.s32.totalorder %s19, 0
      %p69 = por %p67, %p68
      %s70 = smul.u32 %s20, 4
      %s71 = sadd.s32 %s70, %s21
      %s72 = smul.u32 %s39, 4
      %s73 = sadd.s32 %s72, %s35
      %s74 = ssub.s32 %s71, %s73
      %s75 = ssub.s32 %s22, %s31
      %s76 = sor.u32 %s74, %s75
      %p77 = scmp.eq.s32.totalorder %s76, 0
      %s79 = sadd.s32 %s78, 1
      %s80 = scalar_select %p77, %s78, %s79
      %p83 = pneg %p77
      %p84 = scmp.eq.s32.totalorder %s13, 7
      %p85 = por %p83, %p84
      %p86 = scmp.ne.s32.totalorder %s78, %s81
      %p87 = scmp.eq.s32.totalorder %s13, 0
      %p88 = por %p86, %p87
      %p89 = scmp.ne.s32.totalorder %s78, %s81
      %p90 = scmp.eq.s32.totalorder %s18, 7
      %p91 = por %p89, %p90
      %p92 = scmp.ne.s32.totalorder %s81, %s82
      %p93 = scmp.eq.s32.totalorder %s18, 0
      %p94 = por %p92, %p93
      %p95 = scmp.ne.s32.totalorder %s81, %s82
      %p96 = scmp.eq.s32.totalorder %s19, 7
      %p97 = por %p95, %p96
      %p99 = scmp.ne.s32.totalorder %s82, %s98
      %p100 = scmp.eq.s32.totalorder %s19, 0
      %p101 = por %p99, %p100
      %p102 = scmp.le.s32.totalorder 1, %s13
      %p103 = scmp.lt.s32.totalorder %s13, 9
      %p104 = pnand %p102, %p103
      %p105 = pneg %p104
      // Predicated region
      $region9: #{tpu_custom_call.1} parent=5 // pred_check
        _
      $region10: #{tpu_custom_call.1} parent=5 // pred_check_branch
        %107 = sbr.rel (%p104) target = $region12
      $region11: #{tpu_custom_call.1} parent=5 // pred_region
        %s108 = ssub.s32 %s13, 1
      $region12: #{tpu_custom_call.1} parent=5 // pred_fallthru
        _
      %p109 = scmp.lt.s32.totalorder %s13, 8
      // Predicated region
      $region13: #{tpu_custom_call.1} parent=5 // pred_check
        %p110 = pneg %p109
      $region14: #{tpu_custom_call.1} parent=5 // pred_check_branch
        %112 = sbr.rel (%p110) target = $region16
      $region15: #{tpu_custom_call.1} parent=5 // pred_region
        // Predicated region
        $region17: #{tpu_custom_call.1} parent=15 // pred_check
          %p113 = pneg %p56
        $region18: #{tpu_custom_call.1} parent=15 // pred_check_branch
          %115 = sbr.rel (%p113) target = $region20
        $region19: #{tpu_custom_call.1} parent=15 // pred_region
          %s116 = sand.u32 %s46, 1
          %s117 = scalar_lea.sflag [#allocation3], %s116
          %s118 = sand.u32 %s46, 1
          %s119 = smul.addr %s118, 8
          %s120 = scalar_lea.vmem [#allocation2], %s119
          %s121 = smul.u32 2, %s21
          %s123 = ssub.s32 128, 128
          %124 = vsyncadd %s117, %s123
          %s125 = smul.addr %s22, 8
          %s126 = sadd.s32 %s121, %s125
          %s127 = smul.addr %s20, 8
          %s128 = sadd.s32 %s126, %s127
          %s129 = smul.addr %s128, 64
          %s130 = scalar_lea.hbm %s0, %s129
          %s132 = sshll.u32 %s120, 4
          %s133 = int_to_ptr.vmem [resolvable:$true] %s132
          %135 = dma.hbm_to_vmem [thread:$0]  %s130, 128, %s133, %s117
        $region20: #{tpu_custom_call.1} parent=15 // pred_fallthru
          _
      $region16: #{tpu_custom_call.1} parent=5 // pred_fallthru
        _
      %p136 = scmp.le.s32.totalorder 1, %s13
      %p137 = scmp.lt.s32.totalorder %s13, 9
      %p138 = pnand %p136, %p137
      %p139 = pneg %p138
      // Predicated region
      $region21: #{tpu_custom_call.1} parent=5 // pred_check
        _
      $region22: #{tpu_custom_call.1} parent=5 // pred_check_branch
        %141 = sbr.rel (%p138) target = $region24
      $region23: #{tpu_custom_call.1} parent=5 // pred_region
        %s142 = ssub.s32 %s13, 1
        %s143 = sand.u32 %s49, 1
        %s144 = scalar_lea.sflag [#allocation3], %s143
        %s145 = sand.u32 %s49, 1
        %s146 = smul.addr %s145, 8
        %s147 = scalar_lea.vmem [#allocation2], %s146
        // Predicated region
        $region25: #{tpu_custom_call.1} parent=23 // pred_check
          %p148 = pneg %p62
        $region26: #{tpu_custom_call.1} parent=23 // pred_check_branch
          %150 = sbr.rel (%p148) target = $region28
        $region27: #{tpu_custom_call.1} parent=23 // pred_region
          %151 = dma.done %s144, 128
        $region28: #{tpu_custom_call.1} parent=23 // pred_fallthru
          _
        %s152 = sand.u32 %s49, 1
        %s153 = scalar_lea.sflag [#allocation3], %s152
        %s154 = sand.u32 %s49, 1
        %s155 = smul.addr %s154, 8
        %s156 = scalar_lea.vmem [#allocation2], %s155
        %p157 = pneg %p62
        %p158 = pneg %p59
        %p159 = pneg %p94
        %p160 = pneg %p91
        %s161 = sand.u32 %s81, 1
        %s162 = scalar_lea.sflag [#allocation4], %s161
        %s163 = sand.u32 %s81, 1
        %s164 = smul.addr %s163, 8
        %s165 = scalar_lea.vmem [#allocation5], %s164
        %s166 = smul.u32 2, %s24
        %s167 = smul.u32 %s23, 4
        %s168 = sadd.s32 %s167, %s24
        %v169 = vld [vmem:[%s147] sm:$0xff]
        %170 = vst [vmem:[%s165] sm:$0xff] %v169
        %s171 = sand.u32 %s81, 1
        %s172 = scalar_lea.sflag [#allocation4], %s171
        %s173 = sand.u32 %s81, 1
        %s174 = smul.addr %s173, 8
        %s175 = scalar_lea.vmem [#allocation5], %s174
        // Predicated region
        $region29: #{tpu_custom_call.1} parent=23 // pred_check
          %p176 = pneg %p91
        $region30: #{tpu_custom_call.1} parent=23 // pred_check_branch
          %178 = sbr.rel (%p176) target = $region32
        $region31: #{tpu_custom_call.1} parent=23 // pred_region
          %s179 = smul.u32 %s23, 4
          %s180 = sadd.s32 %s179, %s24
          %s182 = ssub.s32 128, 128
          %183 = vsyncadd %s172, %s182
          %s184 = smul.addr %s25, 2
          %s185 = smul.addr %s180, 2
          %s186 = sadd.s32 %s184, %s185
          %s187 = smul.addr %s186, 64
          %s188 = scalar_lea.hbm %s1, %s187
          %s190 = sshll.u32 %s175, 4
          %s191 = int_to_ptr.vmem [resolvable:$true] %s190
          %193 = dma.vmem_to_hbm [thread:$0]  %s191, 128, %s188, %s172
        $region32: #{tpu_custom_call.1} parent=23 // pred_fallthru
          _
      $region24: #{tpu_custom_call.1} parent=5 // pred_fallthru
        _
      %p194 = scmp.le.s32.totalorder 2, %s13
      // Predicated region
      $region33: #{tpu_custom_call.1} parent=5 // pred_check
        %p195 = pneg %p194
      $region34: #{tpu_custom_call.1} parent=5 // pred_check_branch
        %197 = sbr.rel (%p195) target = $region36
      $region35: #{tpu_custom_call.1} parent=5 // pred_region
        %s198 = ssub.s32 %s13, 2
        // Predicated region
        $region37: #{tpu_custom_call.1} parent=35 // pred_check
          %p199 = pneg %p97
        $region38: #{tpu_custom_call.1} parent=35 // pred_check_branch
          %201 = sbr.rel (%p199) target = $region40
        $region39: #{tpu_custom_call.1} parent=35 // pred_region
          %s202 = sand.u32 %s82, 1
          %s203 = scalar_lea.sflag [#allocation4], %s202
          %s204 = sand.u32 %s82, 1
          %s205 = smul.addr %s204, 8
          %s206 = scalar_lea.vmem [#allocation5], %s205
          %207 = dma.done %s203, 128
        $region40: #{tpu_custom_call.1} parent=35 // pred_fallthru
          _
      $region36: #{tpu_custom_call.1} parent=5 // pred_fallthru
        _
    $region6: #{tpu_custom_call.1} parent=1 // loop_footer
      %s17 = sadd.s32 1, %s13
    $region7: #{tpu_custom_call.1} parent=1 // loop_footer_branch
      %12 = sbr.rel target = $region3
    $region8: #{tpu_custom_call.1} parent=1 // loop_exit
      _
    %208 = vsyncpa [#allocation3], 1
    %s209 = scalar_lea.sflag [#allocation3], 1
    %210 = vsyncpa %s209, 1
    %211 = vsyncpa [#allocation4], 1
    %s212 = scalar_lea.sflag [#allocation4], 1
    %213 = vsyncpa %s212, 1

</llo_original>
